<compile_context>
chip_gen: v5e
topology: v5e:2x2
jax: 0.10.0
libtpu: 0.0.40
codegen_flags: <defaults>
</compile_context>

<pallas_src>
import functools

import jax
import jax.numpy as jnp
from jax.experimental import pallas as pl
from jax.experimental.pallas import tpu as pltpu

BN_EPS = 1e-5


def _round_up(x, m):
    return (x + m - 1) // m * m


def fcnn_kernel(x_ref, w1_ref, b1_ref, gamma_ref, beta_ref, w2_ref, b2_ref,
                o_ref, acc_ref, *, true_b):
    """One H-tile per grid step; fc2 is a reduction over the H grid axis."""
    k = pl.program_id(0)

    @pl.when(k == 0)
    def _():
        acc_ref[...] = jnp.zeros_like(acc_ref)

    # ---- fc1 tile: [B_pad, tH] (bf16 operands on the MXU, f32 accumulate) ----
    h = jnp.dot(x_ref[...].astype(jnp.bfloat16),
                w1_ref[...].astype(jnp.bfloat16),
                preferred_element_type=jnp.float32) + b1_ref[...]

    # ---- BatchNorm1d (train mode): one-pass sum / sum-of-squares, all in f32 ----
    if true_b != h.shape[0]:
        # Padded batch rows must not contaminate the batch statistics.
        row_ids = jax.lax.broadcasted_iota(jnp.int32, h.shape, 0)
        h_stats = jnp.where(row_ids < true_b, h, 0.0)
    else:
        h_stats = h
    inv_b = 1.0 / float(true_b)
    s = jnp.sum(h_stats, axis=0, keepdims=True)
    ss = jnp.sum(h_stats * h_stats, axis=0, keepdims=True)
    mean = s * inv_b
    var = ss * inv_b - mean * mean                  # biased variance
    inv_std = jax.lax.rsqrt(var + BN_EPS)
    scale = gamma_ref[...] * inv_std                # folded BN scale
    shift = beta_ref[...] - mean * scale            # folded BN shift
    a = jnp.maximum(h * scale + shift, 0.0)         # BN + ReLU as one FMA + max

    # ---- fc2 partial product, accumulated across H tiles ----
    acc_ref[...] += jnp.dot(a.astype(jnp.bfloat16),
                            w2_ref[...].astype(jnp.bfloat16),
                            preferred_element_type=jnp.float32)

    @pl.when(k == pl.num_programs(0) - 1)
    def _():
        o_ref[...] = (acc_ref[...] + b2_ref[...]).astype(o_ref.dtype)


def fcnn_forward(x, w1, b1, gamma, beta, w2, b2):
    """x: [B, D_in]; w1: [D_in, H]; b1/gamma/beta: [1, H]; w2: [H, C]; b2: [1, C]."""
    B, D = x.shape
    H = w1.shape[1]
    C = w2.shape[1]

    # Lane/sublane alignment.
    B_pad = _round_up(B, 16)
    D_pad = _round_up(D, 128)
    H_pad = _round_up(H, 128)
    C_pad = _round_up(C, 128)

    x_p = jnp.pad(x.astype(jnp.float32), ((0, B_pad - B), (0, D_pad - D)))
    w1_p = jnp.pad(w1, ((0, D_pad - D), (0, H_pad - H)))
    b1_p = jnp.pad(b1, ((0, 0), (0, H_pad - H)))
    g_p = jnp.pad(gamma, ((0, 0), (0, H_pad - H)))   # gamma padded with 0 -> pad columns inert
    be_p = jnp.pad(beta, ((0, 0), (0, H_pad - H)))
    w2_p = jnp.pad(w2, ((0, H_pad - H), (0, C_pad - C)))
    b2_p = jnp.pad(b2, ((0, 0), (0, C_pad - C)))

    # Hidden-dimension tile size (multiple of 128, bounded so per-tile VMEM stays modest
    # even on v7x's 64 MiB VMEM / 32 MiB scoped default).
    if H_pad % 512 == 0:
        tH = 512
    elif H_pad % 256 == 0:
        tH = 256
    else:
        tH = 128
    num_tiles = H_pad // tH

    # VMEM budget estimate: resident x/out/acc + double-buffered per-tile operands.
    f32 = 4
    per_tile = (D_pad * tH + 3 * tH + tH * C_pad + C_pad) * f32
    resident = (B_pad * D_pad + 2 * B_pad * C_pad + B_pad * tH) * f32
    vmem_limit = int(min(max(2 * (resident + 2 * per_tile), 8 << 20), 110 << 20))

    kernel = functools.partial(fcnn_kernel, true_b=B)

    out = pl.pallas_call(
        kernel,
        out_shape=jax.ShapeDtypeStruct((B_pad, C_pad), jnp.float32),
        grid_spec=pltpu.PrefetchScalarGridSpec(
            num_scalar_prefetch=0,
            grid=(num_tiles,),
            in_specs=[
                pl.BlockSpec((B_pad, D_pad), lambda k: (0, 0)),   # x (resident every step)
                pl.BlockSpec((D_pad, tH), lambda k: (0, k)),      # w1 H-tile
                pl.BlockSpec((1, tH), lambda k: (0, k)),          # b1
                pl.BlockSpec((1, tH), lambda k: (0, k)),          # gamma
                pl.BlockSpec((1, tH), lambda k: (0, k)),          # beta
                pl.BlockSpec((tH, C_pad), lambda k: (k, 0)),      # w2 H-tile
                pl.BlockSpec((1, C_pad), lambda k: (0, 0)),       # b2
            ],
            out_specs=pl.BlockSpec((B_pad, C_pad), lambda k: (0, 0)),
            scratch_shapes=[pltpu.VMEM((B_pad, C_pad), jnp.float32)],
        ),
        compiler_params=pltpu.CompilerParams(
            dimension_semantics=("arbitrary",),        # fc2 reduction over H tiles
            vmem_limit_bytes=vmem_limit,
        ),
    )(x_p, w1_p, b1_p, g_p, be_p, w2_p, b2_p)
    return out[:B, :C]


def init_params(key, input_layer_size, hidden_layer_size, num_classes):
    """Deterministic init mimicking nn.Linear's uniform(-1/sqrt(fan_in), 1/sqrt(fan_in))."""
    k1, k2, k3, k4 = jax.random.split(key, 4)
    bound1 = 1.0 / (input_layer_size ** 0.5)
    bound2 = 1.0 / (hidden_layer_size ** 0.5)
    # Stored transposed relative to torch: [in, out].
    w1 = jax.random.uniform(k1, (input_layer_size, hidden_layer_size),
                            jnp.float32, -bound1, bound1)
    b1 = jax.random.uniform(k2, (1, hidden_layer_size), jnp.float32, -bound1, bound1)
    gamma = jnp.ones((1, hidden_layer_size), jnp.float32)   # BatchNorm1d weight init
    beta = jnp.zeros((1, hidden_layer_size), jnp.float32)   # BatchNorm1d bias init
    w2 = jax.random.uniform(k3, (hidden_layer_size, num_classes),
                            jnp.float32, -bound2, bound2)
    b2 = jax.random.uniform(k4, (1, num_classes), jnp.float32, -bound2, bound2)
    return w1, b1, gamma, beta, w2, b2


if __name__ == "__main__":
    batch = 8
    input_layer_size = 16
    hidden_layer_size = 32
    num_classes = 4

    key = jax.random.PRNGKey(0)
    kx, kp = jax.random.split(key)
    x = jax.random.normal(kx, (batch, input_layer_size), jnp.float32)
    params = init_params(kp, input_layer_size, hidden_layer_size, num_classes)

    out = fcnn_forward(x, *params)
    jax.block_until_ready(out)

    # Pure-JAX f32 reference (train-mode BatchNorm1d: batch mean, biased variance).
    w1, b1, gamma, beta, w2, b2 = params
    h = x @ w1 + b1
    mean = h.mean(0, keepdims=True)
    var = ((h - mean) ** 2).mean(0, keepdims=True)
    ref = jnp.maximum((h - mean) * jax.lax.rsqrt(var + BN_EPS) * gamma + beta, 0.0) @ w2 + b2

    assert out.shape == (batch, num_classes)
    # bf16 MXU operands -> slightly looser tolerance than pure-f32.
    assert jnp.allclose(out, ref, atol=5e-2, rtol=5e-2), float(jnp.max(jnp.abs(out - ref)))

    print("KERNEL_OK")
</pallas_src>

<mosaic_0001>
module attributes {stable_mosaic.version = 11 : i64} {
  func.func @fcnn_kernel(%arg0: i32, %arg1: memref<16x128xf32, #tpu.memory_space<vmem>>, %arg2: memref<128x128xf32, #tpu.memory_space<vmem>>, %arg3: memref<1x128xf32, #tpu.memory_space<vmem>>, %arg4: memref<1x128xf32, #tpu.memory_space<vmem>>, %arg5: memref<1x128xf32, #tpu.memory_space<vmem>>, %arg6: memref<128x128xf32, #tpu.memory_space<vmem>>, %arg7: memref<1x128xf32, #tpu.memory_space<vmem>>, %arg8: memref<16x128xf32, #tpu.memory_space<vmem>>, %arg9: memref<16x128xf32, #tpu.memory_space<vmem>>) attributes {dimension_semantics = [#tpu.dimension_semantics<arbitrary>], iteration_bounds = array<i64: 1>, scalar_prefetch = 0 : i64, scratch_operands = 1 : i64, tpu.core_type = #tpu.core_type<tc>, window_params = [{pipeline_mode = #tpu.pipeline_mode<synchronous>, transform_indices = @transform_0, window_bounds = array<i64: 16, 128>}, {transform_indices = @transform_1, window_bounds = array<i64: 128, 128>}, {transform_indices = @transform_2, window_bounds = array<i64: 1, 128>}, {transform_indices = @transform_3, window_bounds = array<i64: 1, 128>}, {transform_indices = @transform_4, window_bounds = array<i64: 1, 128>}, {transform_indices = @transform_5, window_bounds = array<i64: 128, 128>}, {pipeline_mode = #tpu.pipeline_mode<synchronous>, transform_indices = @transform_6, window_bounds = array<i64: 1, 128>}, {pipeline_mode = #tpu.pipeline_mode<synchronous>, transform_indices = @transform_7, window_bounds = array<i64: 16, 128>}]} {
    %c0_i32 = arith.constant 0 : i32
    %0 = arith.cmpi eq, %arg0, %c0_i32 : i32
    %1 = arith.extui %0 : i1 to i32
    %c0_i32_0 = arith.constant 0 : i32
    %2 = arith.cmpi ne, %1, %c0_i32_0 : i32
    scf.if %2 {
      %cst_26 = arith.constant 0.000000e+00 : f32
      %51 = vector.broadcast %cst_26 : f32 to vector<16x128xf32>
      %c0_27 = arith.constant 0 : index
      %c0_28 = arith.constant 0 : index
      %52 = vector.load %arg9[%c0_27, %c0_28] : memref<16x128xf32, #tpu.memory_space<vmem>>, vector<16x128xf32>
      tpu.vector_store %arg9[%c0_27, %c0_28], %51 {strides = array<i32>} : memref<16x128xf32, #tpu.memory_space<vmem>>, vector<16x128xf32>,
    } else {
    }
    %c0 = arith.constant 0 : index
    %c0_1 = arith.constant 0 : index
    %3 = vector.load %arg1[%c0, %c0_1] : memref<16x128xf32, #tpu.memory_space<vmem>>, vector<16x128xf32>
    %4 = arith.truncf %3 : vector<16x128xf32> to vector<16x128xbf16>
    %c0_2 = arith.constant 0 : index
    %c0_3 = arith.constant 0 : index
    %5 = vector.load %arg2[%c0_2, %c0_3] : memref<128x128xf32, #tpu.memory_space<vmem>>, vector<128x128xf32>
    %6 = arith.truncf %5 : vector<128x128xf32> to vector<128x128xbf16>
    %cst = arith.constant dense<0.000000e+00> : vector<16x128xf32>
    %7 = tpu.matmul %4, %6, %cst {dimension_numbers = #tpu.dot_dimension_numbers<[1], [0], [0], [1], [0, 0, 1, 1], [], []>} : vector<16x128xbf16>, vector<128x128xbf16>, vector<16x128xf32> -> vector<16x128xf32>
    %c0_4 = arith.constant 0 : index
    %c0_5 = arith.constant 0 : index
    %8 = vector.load %arg3[%c0_4, %c0_5] : memref<1x128xf32, #tpu.memory_space<vmem>>, vector<1x128xf32>
    %9 = vector.broadcast %8 : vector<1x128xf32> to vector<16x128xf32>
    %10 = arith.addf %7, %9 : vector<16x128xf32>
    %11 = tpu.iota {dimensions = array<i32: 0>} : vector<16x128xi32>
    %c8_i32 = arith.constant 8 : i32
    %12 = vector.broadcast %c8_i32 : i32 to vector<16x128xi32>
    %13 = arith.cmpi slt, %11, %12 : vector<16x128xi32>
    %cst_6 = arith.constant 0.000000e+00 : f32
    %14 = vector.broadcast %cst_6 : f32 to vector<16x128xf32>
    %15 = arith.select %13, %10, %14 : vector<16x128xi1>, vector<16x128xf32>
    %cst_7 = arith.constant dense<0.000000e+00> : vector<128xf32>
    %16 = vector.multi_reduction <add>, %15, %cst_7 [0] : vector<16x128xf32> to vector<128xf32>
    %17 = vector.shape_cast %16 : vector<128xf32> to vector<1x128xf32>
    %18 = arith.mulf %15, %15 : vector<16x128xf32>
    %cst_8 = arith.constant dense<0.000000e+00> : vector<128xf32>
    %19 = vector.multi_reduction <add>, %18, %cst_8 [0] : vector<16x128xf32> to vector<128xf32>
    %20 = vector.shape_cast %19 : vector<128xf32> to vector<1x128xf32>
    %cst_9 = arith.constant 1.250000e-01 : f32
    %21 = vector.broadcast %cst_9 : f32 to vector<1x128xf32>
    %22 = arith.mulf %17, %21 : vector<1x128xf32>
    %cst_10 = arith.constant 1.250000e-01 : f32
    %23 = vector.broadcast %cst_10 : f32 to vector<1x128xf32>
    %24 = arith.mulf %20, %23 : vector<1x128xf32>
    %25 = arith.mulf %22, %22 : vector<1x128xf32>
    %26 = arith.subf %24, %25 : vector<1x128xf32>
    %cst_11 = arith.constant 9.99999974E-6 : f32
    %27 = vector.broadcast %cst_11 : f32 to vector<1x128xf32>
    %28 = arith.addf %26, %27 : vector<1x128xf32>
    %29 = math.rsqrt %28 : vector<1x128xf32>
    %c0_12 = arith.constant 0 : index
    %c0_13 = arith.constant 0 : index
    %30 = vector.load %arg4[%c0_12, %c0_13] : memref<1x128xf32, #tpu.memory_space<vmem>>, vector<1x128xf32>
    %31 = arith.mulf %30, %29 : vector<1x128xf32>
    %c0_14 = arith.constant 0 : index
    %c0_15 = arith.constant 0 : index
    %32 = vector.load %arg5[%c0_14, %c0_15] : memref<1x128xf32, #tpu.memory_space<vmem>>, vector<1x128xf32>
    %33 = arith.mulf %22, %31 : vector<1x128xf32>
    %34 = arith.subf %32, %33 : vector<1x128xf32>
    %35 = vector.broadcast %31 : vector<1x128xf32> to vector<16x128xf32>
    %36 = arith.mulf %10, %35 : vector<16x128xf32>
    %37 = vector.broadcast %34 : vector<1x128xf32> to vector<16x128xf32>
    %38 = arith.addf %36, %37 : vector<16x128xf32>
    %cst_16 = arith.constant 0.000000e+00 : f32
    %39 = vector.broadcast %cst_16 : f32 to vector<16x128xf32>
    %40 = arith.maximumf %38, %39 : vector<16x128xf32>
    %c0_17 = arith.constant 0 : index
    %c0_18 = arith.constant 0 : index
    %41 = vector.load %arg9[%c0_17, %c0_18] : memref<16x128xf32, #tpu.memory_space<vmem>>, vector<16x128xf32>
    %42 = arith.truncf %40 : vector<16x128xf32> to vector<16x128xbf16>
    %c0_19 = arith.constant 0 : index
    %c0_20 = arith.constant 0 : index
    %43 = vector.load %arg6[%c0_19, %c0_20] : memref<128x128xf32, #tpu.memory_space<vmem>>, vector<128x128xf32>
    %44 = arith.truncf %43 : vector<128x128xf32> to vector<128x128xbf16>
    %cst_21 = arith.constant dense<0.000000e+00> : vector<16x128xf32>
    %45 = tpu.matmul %42, %44, %cst_21 {dimension_numbers = #tpu.dot_dimension_numbers<[1], [0], [0], [1], [0, 0, 1, 1], [], []>} : vector<16x128xbf16>, vector<128x128xbf16>, vector<16x128xf32> -> vector<16x128xf32>
    %46 = arith.addf %41, %45 : vector<16x128xf32>
    %c0_22 = arith.constant 0 : index
    %c0_23 = arith.constant 0 : index
    %47 = vector.load %arg9[%c0_22, %c0_23] : memref<16x128xf32, #tpu.memory_space<vmem>>, vector<16x128xf32>
    tpu.vector_store %arg9[%c0_22, %c0_23], %46 {strides = array<i32>} : memref<16x128xf32, #tpu.memory_space<vmem>>, vector<16x128xf32>,
    %c0_i32_24 = arith.constant 0 : i32
    %48 = arith.cmpi eq, %arg0, %c0_i32_24 : i32
    %49 = arith.extui %48 : i1 to i32
    %c0_i32_25 = arith.constant 0 : i32
    %50 = arith.cmpi ne, %49, %c0_i32_25 : i32
    scf.if %50 {
      %c0_26 = arith.constant 0 : index
      %c0_27 = arith.constant 0 : index
      %51 = vector.load %arg9[%c0_26, %c0_27] : memref<16x128xf32, #tpu.memory_space<vmem>>, vector<16x128xf32>
      %c0_28 = arith.constant 0 : index
      %c0_29 = arith.constant 0 : index
      %52 = vector.load %arg7[%c0_28, %c0_29] : memref<1x128xf32, #tpu.memory_space<vmem>>, vector<1x128xf32>
      %53 = vector.broadcast %52 : vector<1x128xf32> to vector<16x128xf32>
      %54 = arith.addf %51, %53 : vector<16x128xf32>
      %c0_30 = arith.constant 0 : index
      %c0_31 = arith.constant 0 : index
      %55 = vector.load %arg8[%c0_30, %c0_31] : memref<16x128xf32, #tpu.memory_space<vmem>>, vector<16x128xf32>
      tpu.vector_store %arg8[%c0_30, %c0_31], %54 {strides = array<i32>} : memref<16x128xf32, #tpu.memory_space<vmem>>, vector<16x128xf32>,
    } else {
    }
    return
  }
  func.func @transform_0(%arg0: i32) -> (i32, i32) {
    %c0_i32 = arith.constant 0 : i32
    %c0_i32_0 = arith.constant 0 : i32
    %c0_i32_1 = arith.constant 0 : i32
    return %c0_i32, %c0_i32_0 : i32, i32
  }
  func.func @transform_1(%arg0: i32) -> (i32, i32) {
    %c0_i32 = arith.constant 0 : i32
    %c0_i32_0 = arith.constant 0 : i32
    return %c0_i32, %arg0 : i32, i32
  }
  func.func @transform_2(%arg0: i32) -> (i32, i32) {
    %c0_i32 = arith.constant 0 : i32
    %c0_i32_0 = arith.constant 0 : i32
    return %c0_i32, %arg0 : i32, i32
  }
  func.func @transform_3(%arg0: i32) -> (i32, i32) {
    %c0_i32 = arith.constant 0 : i32
    %c0_i32_0 = arith.constant 0 : i32
    return %c0_i32, %arg0 : i32, i32
  }
  func.func @transform_4(%arg0: i32) -> (i32, i32) {
    %c0_i32 = arith.constant 0 : i32
    %c0_i32_0 = arith.constant 0 : i32
    return %c0_i32, %arg0 : i32, i32
  }
  func.func @transform_5(%arg0: i32) -> (i32, i32) {
    %c0_i32 = arith.constant 0 : i32
    %c0_i32_0 = arith.constant 0 : i32
    return %arg0, %c0_i32 : i32, i32
  }
  func.func @transform_6(%arg0: i32) -> (i32, i32) {
    %c0_i32 = arith.constant 0 : i32
    %c0_i32_0 = arith.constant 0 : i32
    %c0_i32_1 = arith.constant 0 : i32
    return %c0_i32, %c0_i32_0 : i32, i32
  }
  func.func @transform_7(%arg0: i32) -> (i32, i32) {
    %c0_i32 = arith.constant 0 : i32
    %c0_i32_0 = arith.constant 0 : i32
    %c0_i32_1 = arith.constant 0 : i32
    return %c0_i32, %c0_i32_0 : i32, i32
  }
}

</mosaic_0001>

<llo_original>
// kernel: tpu_custom_call.1
$region0: #{tpu_custom_call.1}
  #allocation0 [shape = 'u32[]', space=smem, size = 0x4, offset = 0x4, fixed_abs, tag = 'smem constant byte address 0x4 - core index']
  #allocation1 [shape = 'u32[72,128]{1,0:T(1,128)}', space=vmem, size = 0x9000, scoped, tag = 'internal scratch']
  #allocation2 [shape = 'f32[16,128]{1,0:T(8,128)}', space=vmem, size = 0x2000, scoped, tag = 'scratch operand']
  %s0 = inlined_call_operand.hbm [shape: f32[16,128], index: 0, kind: input, shape index: {}]
  %s1 = inlined_call_operand.hbm [shape: f32[128,128], index: 1, kind: input, shape index: {}]
  %s2 = inlined_call_operand.vmem [shape: f32[1,128], index: 2, kind: input, shape index: {}]
  %s3 = inlined_call_operand.vmem [shape: f32[1,128], index: 3, kind: input, shape index: {}]
  %s4 = inlined_call_operand.vmem [shape: f32[1,128], index: 4, kind: input, shape index: {}]
  %s5 = inlined_call_operand.hbm [shape: f32[128,128], index: 5, kind: input, shape index: {}]
  %s6 = inlined_call_operand.vmem [shape: f32[1,128], index: 6, kind: input, shape index: {}]
  %s7 = inlined_call_operand.hbm [shape: f32[16,128], index: 7, kind: output, shape index: {}]
  %s8 = sld [smem:[#allocation0]]
  $region58: #{tpu_custom_call.1} parent=0
    _
  %s10 = ssub.s32 1, %s8
  %s11 = scalar_select 0, %s10, %s8
  $region1: #{tpu_custom_call.1} parent=0
    #allocation3 [shape = 'u8[8192]{0}', space=vmem, size = 0x2000, scoped, tag = 'input window, operand 0, single buffered']
    #allocation4 [shape = 's32[1]{0}', space=sflag, size = 0x4, scoped, tag = 'scoped memory for tpu_custom_call.1']
    #allocation5 [shape = 's32[1]{0}', space=sflag, size = 0x4, scoped, tag = 'scoped memory for tpu_custom_call.1']
    #allocation6 [shape = 'u8[65536]{0}', space=vmem, size = 0x10000, scoped, tag = 'input window, operand 1, single buffered']
    #allocation7 [shape = 's32[1]{0}', space=sflag, size = 0x4, scoped, tag = 'scoped memory for tpu_custom_call.1']
    #allocation8 [shape = 'u8[65536]{0}', space=vmem, size = 0x10000, scoped, tag = 'input window, operand 5, single buffered']
    #allocation9 [shape = 'u8[8192]{0}', space=vmem, size = 0x2000, scoped, tag = 'output window, operand 0, single buffered']
    %12 = vsyncpa [#allocation4], 0
    %13 = vsyncpa [#allocation7], 0
    %14 = vsyncpa [#allocation5], 0
    // Predicated region
    $region2: #{tpu_custom_call.1} parent=1 // pred_check
      _
    $region3: #{tpu_custom_call.1} parent=1 // pred_check_branch
      %16 = sbr.rel (0) target = $region5
    $region4: #{tpu_custom_call.1} parent=1 // pred_region
      %18 = vsyncadd [#allocation4], 0
      %s19 = sshll.u32 %s0, 4
      %s20 = int_to_ptr.hbm [resolvable:$true] %s19
      %s21 = sshll.u32 [#allocation3], 4
      %s22 = int_to_ptr.vmem [resolvable:$true] %s21
      %27 = dma.hbm_to_vmem [thread:$0]  %s20, 256, %s22, [#allocation4], 128, 128, 8
    $region5: #{tpu_custom_call.1} parent=1 // pred_fallthru
      _
    // Predicated region
    $region6: #{tpu_custom_call.1} parent=1 // pred_check
      _
    $region7: #{tpu_custom_call.1} parent=1 // pred_check_branch
      %29 = sbr.rel (0) target = $region9
    $region8: #{tpu_custom_call.1} parent=1 // pred_region
      %31 = vsyncadd [#allocation7], 0
      %s32 = sshll.u32 %s1, 4
      %s33 = int_to_ptr.hbm [resolvable:$true] %s32
      %s34 = sshll.u32 [#allocation6], 4
      %s35 = int_to_ptr.vmem [resolvable:$true] %s34
      %40 = dma.hbm_to_vmem [thread:$0]  %s33, 2048, %s35, [#allocation7], 128, 128, 8
    $region9: #{tpu_custom_call.1} parent=1 // pred_fallthru
      _
    // Predicated region
    $region10: #{tpu_custom_call.1} parent=1 // pred_check
      _
    $region11: #{tpu_custom_call.1} parent=1 // pred_check_branch
      %42 = sbr.rel (0) target = $region13
    $region12: #{tpu_custom_call.1} parent=1 // pred_region
      _
    $region13: #{tpu_custom_call.1} parent=1 // pred_fallthru
      _
    // Predicated region
    $region14: #{tpu_custom_call.1} parent=1 // pred_check
      _
    $region15: #{tpu_custom_call.1} parent=1 // pred_check_branch
      %44 = sbr.rel (0) target = $region17
    $region16: #{tpu_custom_call.1} parent=1 // pred_region
      _
    $region17: #{tpu_custom_call.1} parent=1 // pred_fallthru
      _
    // Predicated region
    $region18: #{tpu_custom_call.1} parent=1 // pred_check
      _
    $region19: #{tpu_custom_call.1} parent=1 // pred_check_branch
      %46 = sbr.rel (0) target = $region21
    $region20: #{tpu_custom_call.1} parent=1 // pred_region
      _
    $region21: #{tpu_custom_call.1} parent=1 // pred_fallthru
      _
    // Predicated region
    $region22: #{tpu_custom_call.1} parent=1 // pred_check
      _
    $region23: #{tpu_custom_call.1} parent=1 // pred_check_branch
      %48 = sbr.rel (0) target = $region25
    $region24: #{tpu_custom_call.1} parent=1 // pred_region
      %50 = vsyncadd [#allocation7], 0
      %s51 = sshll.u32 %s5, 4
      %s52 = int_to_ptr.hbm [resolvable:$true] %s51
      %s53 = sshll.u32 [#allocation8], 4
      %s54 = int_to_ptr.vmem [resolvable:$true] %s53
      %59 = dma.hbm_to_vmem [thread:$0]  %s52, 2048, %s54, [#allocation7], 128, 128, 8
    $region25: #{tpu_custom_call.1} parent=1 // pred_fallthru
      _
    // Predicated region
    $region26: #{tpu_custom_call.1} parent=1 // pred_check
      _
    $region27: #{tpu_custom_call.1} parent=1 // pred_check_branch
      %61 = sbr.rel (0) target = $region29
    $region28: #{tpu_custom_call.1} parent=1 // pred_region
      _
    $region29: #{tpu_custom_call.1} parent=1 // pred_fallthru
      _
    // Predicated region
    $region30: #{tpu_custom_call.1} parent=1 // pred_check
      _
    $region31: #{tpu_custom_call.1} parent=1 // pred_check_branch
      %63 = sbr.rel (0) target = $region33
    $region32: #{tpu_custom_call.1} parent=1 // pred_region
      %65 = dma.done [#allocation4], 256
    $region33: #{tpu_custom_call.1} parent=1 // pred_fallthru
      _
    // Predicated region
    $region34: #{tpu_custom_call.1} parent=1 // pred_check
      _
    $region35: #{tpu_custom_call.1} parent=1 // pred_check_branch
      %67 = sbr.rel (0) target = $region37
    $region36: #{tpu_custom_call.1} parent=1 // pred_region
      %69 = dma.done [#allocation7], 2048
    $region37: #{tpu_custom_call.1} parent=1 // pred_fallthru
      _
    // Predicated region
    $region38: #{tpu_custom_call.1} parent=1 // pred_check
      _
    $region39: #{tpu_custom_call.1} parent=1 // pred_check_branch
      %71 = sbr.rel (0) target = $region41
    $region40: #{tpu_custom_call.1} parent=1 // pred_region
      %73 = dma.done [#allocation7], 2048
    $region41: #{tpu_custom_call.1} parent=1 // pred_fallthru
      _
    %p74 = scmp.eq.s32.totalorder 0, 0
    // Predicated region
    $region42: #{tpu_custom_call.1} parent=1 // pred_check
      %p75 = pneg %p74
    $region43: #{tpu_custom_call.1} parent=1 // pred_check_branch
      %77 = sbr.rel (%p75) target = $region45
    $region44: #{tpu_custom_call.1} parent=1 // pred_region
      %78 = vst [vmem:[#allocation2] sm:$0xff] 0.0
      %79 = vst [vmem:[#allocation2 + $0x8] sm:$0xff] 0.0
    $region45: #{tpu_custom_call.1} parent=1 // pred_fallthru
      _
    %v80 = vld [vmem:[#allocation3] sm:$0xff]
    %v81 = vld [vmem:[#allocation3 + $0x8] sm:$0xff]
    %v82 = vpack.c.bf16 %v81, %v80
    %v83 = vld [vmem:[#allocation6] sm:$0xff]
    %v84 = vld [vmem:[#allocation6 + $0x8] sm:$0xff]
    %v85 = vld [vmem:[#allocation6 + $0x10] sm:$0xff]
    %v86 = vld [vmem:[#allocation6 + $0x18] sm:$0xff]
    %v87 = vld [vmem:[#allocation6 + $0x20] sm:$0xff]
    %v88 = vld [vmem:[#allocation6 + $0x28] sm:$0xff]
    %v89 = vld [vmem:[#allocation6 + $0x30] sm:$0xff]
    %v90 = vld [vmem:[#allocation6 + $0x38] sm:$0xff]
    %v91 = vld [vmem:[#allocation6 + $0x40] sm:$0xff]
    %v92 = vld [vmem:[#allocation6 + $0x48] sm:$0xff]
    %v93 = vld [vmem:[#allocation6 + $0x50] sm:$0xff]
    %v94 = vld [vmem:[#allocation6 + $0x58] sm:$0xff]
    %v95 = vld [vmem:[#allocation6 + $0x60] sm:$0xff]
    %v96 = vld [vmem:[#allocation6 + $0x68] sm:$0xff]
    %v97 = vld [vmem:[#allocation6 + $0x70] sm:$0xff]
    %v98 = vld [vmem:[#allocation6 + $0x78] sm:$0xff]
    %v99 = vpack.c.bf16 %v84, %v83
    %v100 = vpack.c.bf16 %v86, %v85
    %v101 = vpack.c.bf16 %v88, %v87
    %v102 = vpack.c.bf16 %v90, %v89
    %v103 = vpack.c.bf16 %v92, %v91
    %v104 = vpack.c.bf16 %v94, %v93
    %v105 = vpack.c.bf16 %v96, %v95
    %v106 = vpack.c.bf16 %v98, %v97
    %v107 = vld [vmem:[%s2] sm:$0x1]
    %v109 = vperm.slane %v107, 0
    %111 = vmatpush.bf16.msra.mxu0 %v106
    %112 = vmatpush.bf16.msra.mxu0 %v105
    %113 = vmatpush.bf16.msra.mxu0 %v104
    %114 = vmatpush.bf16.msra.mxu0 %v103
    %115 = vmatpush.bf16.msra.mxu0 %v102
    %116 = vmatpush.bf16.msra.mxu0 %v101
    %117 = vmatpush.bf16.msra.mxu0 %v100
    %118 = vmatpush.bf16.msra.mxu0 %v99
    %119 = vmatmul.bf16.gmra.mxu0 %v82
    %v120 = vpop.f32.mrf.mxu0
    %v121 = vadd.f32 %v109, %v120
    %v122 = vpop.f32.mrf.mxu0
    %v123 = vadd.f32 %v109, %v122
    %124 = vdwg.mxu0
    %v125 = vlaneseq
    %v126 = vshrl.u32 %v125, 7
    %v127 = vadd.s32 %v126, 8
    %vm128 = vcmp.lt.s32.totalorder %v126, 8
    %vm129 = vcmp.lt.s32.totalorder %v127, 8
    %v130 = vsel %vm128, %v121, 0.0
    %v131 = vsel %vm129, %v123, 0.0
    %v132 = vadd.f32 %v130, %v131
    %v133 = vrot.slane %v132, 4
    %v134 = vadd.f32 %v132, %v133
    %v135 = vrot.slane %v134, 2
    %v136 = vadd.f32 %v134, %v135
    %v137 = vrot.slane %v136, 1
    %v138 = vadd.f32 %v136, %v137
    %v139 = vmul.f32 %v130, %v130
    %v140 = vmul.f32 %v131, %v131
    %v141 = vadd.f32 %v139, %v140
    %v142 = vrot.slane %v141, 4
    %v143 = vadd.f32 %v141, %v142
    %v144 = vrot.slane %v143, 2
    %v145 = vadd.f32 %v143, %v144
    %v146 = vrot.slane %v145, 1
    %v147 = vadd.f32 %v145, %v146
    %v148 = vmul.f32 %v138, 0.125
    %v149 = vmul.f32 %v147, 0.125
    %v150 = vmul.f32 %v148, %v148
    %v151 = vsub.f32 %v149, %v150
    %v152 = vadd.f32 %v151, 1e-05
    %v153 = vrsqrt.pop %v152
    %v154 = vmul.f32 %v153, %v152
    %v155 = vmul.f32 %v154, %v153
    %v156 = vmul.f32 0.5, %v155
    %v157 = vsub.f32 1.5, %v156
    %v158 = vmul.f32 %v153, %v157
    %vm159 = vweird.f32 %v152
    %vm160 = vweird.f32 %v153
    %vm161 = vmor %vm159, %vm160
    %v162 = vsel %vm161, %v153, %v158
    %v163 = vld [vmem:[%s3] sm:$0x1]
    %v164 = vmul.f32 %v163, %v162
    %v165 = vld [vmem:[%s4] sm:$0x1]
    %v166 = vmul.f32 %v148, %v164
    %v167 = vsub.f32 %v165, %v166
    %v169 = vperm.slane %v164, 0
    %v171 = vmul.f32 %v121, %v169
    %v172 = vmul.f32 %v123, %v169
    %v174 = vperm.slane %v167, 0
    %v176 = vadd.f32 %v171, %v174
    %v177 = vadd.f32 %v172, %v174
    %v178 = vmax.f32 %v176, 0.0
    %v179 = vmax.f32 %v177, 0.0
    %v180 = vld [vmem:[#allocation2] sm:$0xff]
    %v181 = vld [vmem:[#allocation2 + $0x8] sm:$0xff]
    %v182 = vpack.c.bf16 %v179, %v178
    %v183 = vld [vmem:[#allocation8] sm:$0xff]
    %v184 = vld [vmem:[#allocation8 + $0x8] sm:$0xff]
    %v185 = vld [vmem:[#allocation8 + $0x10] sm:$0xff]
    %v186 = vld [vmem:[#allocation8 + $0x18] sm:$0xff]
    %v187 = vld [vmem:[#allocation8 + $0x20] sm:$0xff]
    %v188 = vld [vmem:[#allocation8 + $0x28] sm:$0xff]
    %v189 = vld [vmem:[#allocation8 + $0x30] sm:$0xff]
    %v190 = vld [vmem:[#allocation8 + $0x38] sm:$0xff]
    %v191 = vld [vmem:[#allocation8 + $0x40] sm:$0xff]
    %v192 = vld [vmem:[#allocation8 + $0x48] sm:$0xff]
    %v193 = vld [vmem:[#allocation8 + $0x50] sm:$0xff]
    %v194 = vld [vmem:[#allocation8 + $0x58] sm:$0xff]
    %v195 = vld [vmem:[#allocation8 + $0x60] sm:$0xff]
    %v196 = vld [vmem:[#allocation8 + $0x68] sm:$0xff]
    %v197 = vld [vmem:[#allocation8 + $0x70] sm:$0xff]
    %v198 = vld [vmem:[#allocation8 + $0x78] sm:$0xff]
    %v199 = vpack.c.bf16 %v184, %v183
    %v200 = vpack.c.bf16 %v186, %v185
    %v201 = vpack.c.bf16 %v188, %v187
    %v202 = vpack.c.bf16 %v190, %v189
    %v203 = vpack.c.bf16 %v192, %v191
    %v204 = vpack.c.bf16 %v194, %v193
    %v205 = vpack.c.bf16 %v196, %v195
    %v206 = vpack.c.bf16 %v198, %v197
    %207 = vmatpush.bf16.msra.mxu0 %v206
    %208 = vmatpush.bf16.msra.mxu0 %v205
    %209 = vmatpush.bf16.msra.mxu0 %v204
    %210 = vmatpush.bf16.msra.mxu0 %v203
    %211 = vmatpush.bf16.msra.mxu0 %v202
    %212 = vmatpush.bf16.msra.mxu0 %v201
    %213 = vmatpush.bf16.msra.mxu0 %v200
    %214 = vmatpush.bf16.msra.mxu0 %v199
    %215 = vmatmul.bf16.gmra.mxu0 %v182
    %v216 = vpop.f32.mrf.mxu0
    %v217 = vadd.f32 0.0, %v216
    %v218 = vpop.f32.mrf.mxu0
    %v219 = vadd.f32 0.0, %v218
    %220 = vdwg.mxu0
    %v221 = vadd.f32 %v180, %v217
    %v222 = vadd.f32 %v181, %v219
    %223 = vst [vmem:[#allocation2] sm:$0xff] %v221
    %224 = vst [vmem:[#allocation2 + $0x8] sm:$0xff] %v222
    // Predicated region
    $region46: #{tpu_custom_call.1} parent=1 // pred_check
      %p225 = pneg %p74
    $region47: #{tpu_custom_call.1} parent=1 // pred_check_branch
      %227 = sbr.rel (%p225) target = $region49
    $region48: #{tpu_custom_call.1} parent=1 // pred_region
      %v228 = vld [vmem:[#allocation2] sm:$0xff]
      %v229 = vld [vmem:[#allocation2 + $0x8] sm:$0xff]
      %v230 = vld [vmem:[%s6] sm:$0x1]
      %v232 = vperm.slane %v230, 0
      %v234 = vadd.f32 %v228, %v232
      %v235 = vadd.f32 %v229, %v232
      %236 = vst [vmem:[#allocation9] sm:$0xff] %v234
      %237 = vst [vmem:[#allocation9 + $0x8] sm:$0xff] %v235
    $region49: #{tpu_custom_call.1} parent=1 // pred_fallthru
      _
    // Predicated region
    $region50: #{tpu_custom_call.1} parent=1 // pred_check
      _
    $region51: #{tpu_custom_call.1} parent=1 // pred_check_branch
      %239 = sbr.rel (0) target = $region53
    $region52: #{tpu_custom_call.1} parent=1 // pred_region
      %241 = vsyncadd [#allocation5], 0
      %s242 = sshll.u32 [#allocation9], 4
      %s243 = int_to_ptr.vmem [resolvable:$true] %s242
      %s244 = sshll.u32 %s7, 4
      %s245 = int_to_ptr.hbm [resolvable:$true] %s244
      %250 = dma.vmem_to_hbm [thread:$0]  %s243, 256, %s245, [#allocation5], 128, 128, 8
    $region53: #{tpu_custom_call.1} parent=1 // pred_fallthru
      _
    // Predicated region
    $region54: #{tpu_custom_call.1} parent=1 // pred_check
      _
    $region55: #{tpu_custom_call.1} parent=1 // pred_check_branch
      %252 = sbr.rel (0) target = $region57
    $region56: #{tpu_custom_call.1} parent=1 // pred_region
      %254 = dma.done [#allocation5], 256
    $region57: #{tpu_custom_call.1} parent=1 // pred_fallthru
      _
    %255 = vsyncpa [#allocation4], 1
    %256 = vsyncpa [#allocation7], 1
    %257 = vsyncpa [#allocation5], 1

</llo_original>
